<compile_context>
chip_gen: v7x
topology: tpu7x:2x2x1
jax: 0.10.0
libtpu: 0.0.40
codegen_flags: <defaults>
</compile_context>

<pallas_src>
import functools

import jax
import jax.numpy as jnp
from jax.experimental import pallas as pl
from jax.experimental.pallas import tpu as pltpu


def _round_up(x: int, m: int) -> int:
    return ((x + m - 1) // m) * m


def _sublane(itemsize: int) -> int:
    # Minimum second-to-last tile dim: 8 for 4-byte, 16 for 2-byte, 32 for 1-byte.
    return max(8, 32 // max(itemsize, 1))


def _target_block_bytes() -> int:
    # Lane-padded HBM/VMEM bytes of h per grid step.  Double buffered this
    # stays well inside the explicit 32 MiB scoped-VMEM limit below on every
    # generation; bump on v7x-class chips (64 MiB VMEM, fastest HBM) so the
    # ~0.35 us fixed per-step cost is amortized against 3.2 TB/s.
    try:
        info = pltpu.get_tpu_info()
        vmem = int(getattr(info, "vmem_capacity_bytes", 0) or 0)
        if 0 < vmem <= 64 * 1024 * 1024:
            return 8 * 1024 * 1024
    except Exception:
        pass
    return 6 * 1024 * 1024


def _disc_kernel(h_ref, w_ref, b_ref, o_ref):
    # h_ref: (td, width) VMEM      w_ref: (g, width) VMEM
    # b_ref: (1, 1) SMEM scalar    o_ref: (1, g, td) VMEM (lane-dense in td)
    #
    # z[j, r] = sum_k w_ref[j, k] * h_ref[r, k]  -- the q@k^T style NT dot
    # (contraction over the lane axis of both operands), so the td logits per
    # weight row land on the 128-wide lane axis -> dense vst's / dense
    # writeback DMAs instead of (td, 1) masked single-lane stores.
    # TODO(synk): verify with pl.lower_as_mlir that Mosaic keeps the tiny
    # weight as the stationary MXU operand (no full-tile relayout of h); if
    # not, switch to the VPU segmented-reduce formulation.
    z = jax.lax.dot_general(
        w_ref[...], h_ref[...],
        dimension_numbers=(((1,), (1,)), ((), ())),
        preferred_element_type=jnp.float32,
    )                                   # (g, td) f32
    z = z + b_ref[0, 0]                 # scalar bias from SMEM
    o_ref[...] = jax.nn.sigmoid(z).astype(o_ref.dtype)[None]


@functools.partial(jax.jit, static_argnames=("block_rows",))
def mlp_discriminator(h, w, b, *, block_rows=None):
    """h: [N, hidden]; w: [1, hidden] (PyTorch Linear layout); b: [1, 1] -> [N, 1]."""
    n, hidden = h.shape
    if n == 0:
        return jnp.zeros((0, 1), dtype=h.dtype)

    itemsize = h.dtype.itemsize
    sublane = _sublane(itemsize)

    # ---- lane densification: [N, hidden] -> [N/g, g*hidden=128] when legal ----
    # (Cheap / intended to be layout-free; ideally the producer already emits
    # h lane-dense.  Ragged N or odd hidden falls back to g=1 with padded
    # lanes, which the sizing below accounts for.)
    g = 1
    if hidden < 128 and 128 % hidden == 0:
        cand = 128 // hidden
        if n % cand == 0 and (n // cand) >= sublane:
            g = cand
    width = g * hidden
    hd = h if g == 1 else h.reshape(n // g, width)
    nd = hd.shape[0]                    # rows actually fed to the kernel

    # Block-diagonal weight (g, width): row j carries w in lanes [j*hidden, (j+1)*hidden).
    if g == 1:
        wd = w.astype(h.dtype)
    else:
        eye = jnp.eye(g, dtype=w.dtype)
        wd = (eye[:, :, None] * w[0][None, None, :]).reshape(g, width).astype(h.dtype)

    # ---- block sizing from the lane-PADDED per-row VMEM cost ----
    padded_row_bytes = _round_up(width, 128) * itemsize
    if block_rows is None:
        block_rows = max(sublane, _target_block_bytes() // padded_row_bytes)
    # Keep >= 4 grid steps (>= 2 per v7x TensorCore) whenever possible.
    quarter = _round_up(pl.cdiv(nd, 4), sublane)
    td = min(_round_up(block_rows, sublane), quarter)
    if td >= 128:
        td = (td // 128) * 128          # keep output stores lane-dense
    grid_n = pl.cdiv(nd, td)

    cost = pl.CostEstimate(
        flops=2 * n * hidden + 4 * n,
        transcendentals=n,
        bytes_accessed=(h.size + n + wd.size + b.size) * itemsize,
    )

    out = pl.pallas_call(
        _disc_kernel,
        out_shape=jax.ShapeDtypeStruct((grid_n, g, td), h.dtype),
        grid_spec=pltpu.PrefetchScalarGridSpec(
            num_scalar_prefetch=0,
            grid=(grid_n,),
            in_specs=[
                pl.BlockSpec((td, width), lambda i: (i, 0)),        # ragged last block OK
                pl.BlockSpec((g, width), lambda i: (0, 0)),         # resident weight
                pl.BlockSpec(memory_space=pltpu.MemorySpace.SMEM),  # bias scalar
            ],
            out_specs=pl.BlockSpec((1, g, td), lambda i: (i, 0, 0)),
        ),
        compiler_params=pltpu.CompilerParams(
            dimension_semantics=("parallel",),
            vmem_limit_bytes=32 * 1024 * 1024,
        ),
        cost_estimate=cost,
    )(hd, wd, b)

    # out[blk, j, r] is the logit of original row (blk*td + r)*g + j, so
    # transposing the (g, td) tile recovers row order when flattened.  The
    # transpose touches only N floats (tiny vs. the N*hidden read of h).
    flat = out.transpose(0, 2, 1).reshape(-1)
    if grid_n * td * g != n:
        flat = flat[:n]                 # drop garbage rows of the ragged tail
    return flat.reshape(n, 1)


def init_params(key, hidden):
    """Mirror torch.nn.Linear(hidden, 1) default init (uniform +-1/sqrt(hidden))."""
    kw, kb = jax.random.split(key)
    bound = 1.0 / (hidden ** 0.5)
    w = jax.random.uniform(kw, (1, hidden), jnp.float32, -bound, bound)  # [out=1, in=hidden]
    b = jax.random.uniform(kb, (1, 1), jnp.float32, -bound, bound)
    return w, b


if __name__ == "__main__":
    key = jax.random.PRNGKey(0)
    k1, k2, k3, kp = jax.random.split(key, 4)

    hidden = 32
    w, b = init_params(kp, hidden)

    def ref(h_, w_, b_):
        return jax.nn.sigmoid(h_.astype(jnp.float32) @ w_.T + b_)

    # Case 1: tiny input, single block, non-densified fallback path.
    h1 = jax.random.normal(k1, (8, hidden), jnp.float32)
    out1 = jax.block_until_ready(mlp_discriminator(h1, w, b))
    assert out1.shape == (8, 1)
    assert jnp.allclose(out1, ref(h1, w, b), atol=1e-5), "mismatch (n=8)"

    # Case 2: lane-densified path, multi-block grid with a ragged final block.
    h2 = jax.random.normal(k2, (300, hidden), jnp.float32)
    out2 = jax.block_until_ready(mlp_discriminator(h2, w, b))
    assert out2.shape == (300, 1)
    assert jnp.allclose(out2, ref(h2, w, b), atol=1e-5), "mismatch (n=300)"

    # Case 3: bf16 inputs (16-row sublane tiles), densified, exact coverage.
    h3 = jax.random.normal(k3, (256, hidden), jnp.float32).astype(jnp.bfloat16)
    out3 = jax.block_until_ready(mlp_discriminator(h3, w, b))
    assert out3.shape == (256, 1)
    assert jnp.allclose(out3.astype(jnp.float32), ref(h3, w, b), atol=2e-2), "mismatch (bf16)"

    # Case 4: empty input guard.
    h4 = jnp.zeros((0, hidden), jnp.float32)
    out4 = jax.block_until_ready(mlp_discriminator(h4, w, b))
    assert out4.shape == (0, 1)

    print("KERNEL_OK")
</pallas_src>

<mosaic_0001>
module attributes {stable_mosaic.version = 11 : i64} {
  func.func @_disc_kernel(%arg0: i32, %arg1: memref<8x32xf32, #tpu.memory_space<vmem>>, %arg2: memref<1x32xf32, #tpu.memory_space<vmem>>, %arg3: memref<1x1xf32, #tpu.memory_space<smem>>, %arg4: memref<1x1x8xf32, #tpu.memory_space<vmem>>) attributes {dimension_semantics = [#tpu.dimension_semantics<parallel>], iteration_bounds = array<i64: 1>, scalar_prefetch = 0 : i64, scratch_operands = 0 : i64, tpu.core_type = #tpu.core_type<tc>, window_params = [{transform_indices = @transform_0, window_bounds = array<i64: 8, 32>}, {pipeline_mode = #tpu.pipeline_mode<synchronous>, transform_indices = @transform_1, window_bounds = array<i64: 1, 32>}, {transform_indices = @transform_2, window_bounds = array<i64: 1, 1>}, {transform_indices = @transform_3, window_bounds = array<i64: 1, 1, 8>}]} {
    %c0 = arith.constant 0 : index
    %c0_0 = arith.constant 0 : index
    %0 = vector.load %arg2[%c0, %c0_0] : memref<1x32xf32, #tpu.memory_space<vmem>>, vector<1x32xf32>
    %c0_1 = arith.constant 0 : index
    %c0_2 = arith.constant 0 : index
    %1 = vector.load %arg1[%c0_1, %c0_2] : memref<8x32xf32, #tpu.memory_space<vmem>>, vector<8x32xf32>
    %cst = arith.constant dense<0.000000e+00> : vector<1x8xf32>
    %2 = tpu.matmul %0, %1, %cst {dimension_numbers = #tpu.dot_dimension_numbers<[1], [1], [0], [0], [0, 0, 1, 0], [], []>} : vector<1x32xf32>, vector<8x32xf32>, vector<1x8xf32> -> vector<1x8xf32>
    %c0_3 = arith.constant 0 : index
    %c0_4 = arith.constant 0 : index
    %3 = memref.load %arg3[%c0_3, %c0_4] : memref<1x1xf32, #tpu.memory_space<smem>>
    %4 = vector.broadcast %3 : f32 to vector<1x8xf32>
    %5 = arith.addf %2, %4 : vector<1x8xf32>
    %6 = arith.negf %5 : vector<1x8xf32>
    %7 = math.exp %6 : vector<1x8xf32>
    %cst_5 = arith.constant 1.000000e+00 : f32
    %8 = vector.broadcast %cst_5 : f32 to vector<1x8xf32>
    %9 = arith.addf %8, %7 : vector<1x8xf32>
    %10 = arith.divf %8, %9 : vector<1x8xf32>
    %11 = vector.shape_cast %10 : vector<1x8xf32> to vector<1x1x8xf32>
    %c0_6 = arith.constant 0 : index
    %c0_7 = arith.constant 0 : index
    %c0_8 = arith.constant 0 : index
    %12 = vector.load %arg4[%c0_6, %c0_7, %c0_8] : memref<1x1x8xf32, #tpu.memory_space<vmem>>, vector<1x1x8xf32>
    tpu.vector_store %arg4[%c0_6, %c0_7, %c0_8], %11 {strides = array<i32>} : memref<1x1x8xf32, #tpu.memory_space<vmem>>, vector<1x1x8xf32>,
    return
  }
  func.func @transform_0(%arg0: i32) -> (i32, i32) {
    %c0_i32 = arith.constant 0 : i32
    %c0_i32_0 = arith.constant 0 : i32
    return %arg0, %c0_i32 : i32, i32
  }
  func.func @transform_1(%arg0: i32) -> (i32, i32) {
    %c0_i32 = arith.constant 0 : i32
    %c0_i32_0 = arith.constant 0 : i32
    %c0_i32_1 = arith.constant 0 : i32
    return %c0_i32, %c0_i32_0 : i32, i32
  }
  func.func @transform_2(%arg0: i32) -> (i32, i32) {
    %c0_i32 = arith.constant 0 : i32
    %c0_i32_0 = arith.constant 0 : i32
    %c0_i32_1 = arith.constant 0 : i32
    return %c0_i32, %c0_i32_0 : i32, i32
  }
  func.func @transform_3(%arg0: i32) -> (i32, i32, i32) {
    %c0_i32 = arith.constant 0 : i32
    %c0_i32_0 = arith.constant 0 : i32
    %c0_i32_1 = arith.constant 0 : i32
    return %arg0, %c0_i32, %c0_i32_0 : i32, i32, i32
  }
}

</mosaic_0001>

<llo_original>
// kernel: mlp_discriminator.1
$region0: #{mlp_discriminator.1}
  #allocation0 [shape = 'u32[]', space=smem, size = 0x4, offset = 0x4, fixed_abs, tag = 'smem constant byte address 0x4 - core index']
  #allocation1 [shape = 'u32[144,128]{1,0:T(1,128)}', space=vmem, size = 0x12000, scoped, tag = 'internal scratch']
  #allocation2 [shape = 'f32[1,1]{1,0:T(1,128)S(6)}', space=smem, size = 0x200, scoped, tag = 'scoped memory for mlp_discriminator.1']
  %s0 = inlined_call_operand.hbm [shape: f32[8,32], index: 0, kind: input, shape index: {}]
  %s1 = inlined_call_operand.vmem [shape: f32[1,32], index: 1, kind: input, shape index: {}]
  %s2 = inlined_call_operand.<no memory space> [shape: f32[1,1], index: 2, kind: input, shape index: {}]
  %s3 = inlined_call_operand.hbm [shape: f32[1,1,8], index: 3, kind: output, shape index: {}]
  %s4 = sld [smem:[#allocation0]]
  $region26: #{mlp_discriminator.1} parent=0
    _
  %s6 = ssub.s32 1, %s4
  %s7 = scalar_select 0, %s6, %s4
  %8 = sst [smem:[#allocation2]] %s2
  $region1: #{mlp_discriminator.1} parent=0
    #allocation3 [shape = 'u8[4096]{0}', space=vmem, size = 0x1000, scoped, tag = 'input window, operand 0, single buffered']
    #allocation4 [shape = 's32[1]{0}', space=sflag, size = 0x4, scoped, tag = 'scoped memory for mlp_discriminator.1']
    #allocation5 [shape = 's32[1]{0}', space=sflag, size = 0x4, scoped, tag = 'scoped memory for mlp_discriminator.1']
    #allocation6 [shape = 'u8[512]{0}', space=vmem, size = 0x400, scoped, tag = 'output window, operand 0, single buffered']
    %9 = vsyncpa [#allocation4], 0
    %10 = vsyncpa [#allocation5], 0
    // Predicated region
    $region2: #{mlp_discriminator.1} parent=1 // pred_check
      _
    $region3: #{mlp_discriminator.1} parent=1 // pred_check_branch
      %12 = sbr.rel (0) target = $region5
    $region4: #{mlp_discriminator.1} parent=1 // pred_region
      %s14 = ssub.s32 128, 128
      %15 = vsyncadd [#allocation4], %s14
      %s17 = sshll.u32 [#allocation3], 4
      %s18 = int_to_ptr.vmem [resolvable:$true] %s17
      %20 = dma.hbm_to_vmem [thread:$0]  %s0, 128, %s18, [#allocation4]
    $region5: #{mlp_discriminator.1} parent=1 // pred_fallthru
      _
    // Predicated region
    $region6: #{mlp_discriminator.1} parent=1 // pred_check
      _
    $region7: #{mlp_discriminator.1} parent=1 // pred_check_branch
      %22 = sbr.rel (0) target = $region9
    $region8: #{mlp_discriminator.1} parent=1 // pred_region
      _
    $region9: #{mlp_discriminator.1} parent=1 // pred_fallthru
      _
    // Predicated region
    $region10: #{mlp_discriminator.1} parent=1 // pred_check
      _
    $region11: #{mlp_discriminator.1} parent=1 // pred_check_branch
      %24 = sbr.rel (0) target = $region13
    $region12: #{mlp_discriminator.1} parent=1 // pred_region
      _
    $region13: #{mlp_discriminator.1} parent=1 // pred_fallthru
      _
    // Predicated region
    $region14: #{mlp_discriminator.1} parent=1 // pred_check
      _
    $region15: #{mlp_discriminator.1} parent=1 // pred_check_branch
      %26 = sbr.rel (0) target = $region17
    $region16: #{mlp_discriminator.1} parent=1 // pred_region
      %27 = dma.done [#allocation4], 128
    $region17: #{mlp_discriminator.1} parent=1 // pred_fallthru
      _
    %v28 = vld [vmem:[%s1] sm:$0x1]
    %v29 = vld [vmem:[#allocation3] sm:$0xff]
    %s30 = sld [smem:[#allocation2]]
    %v31 = vstv %s30
    %vm32 = vcmask 261120
    %v34 = vsel %vm32, %v28, 0
    %v37 = vsel %vm32, %v29, 0
    %39 = vmatprep.subr.mxu0 0.0
    %40 = vmatpush1.xpose.msra.mxu0 %v37
    %41 = vmatprep.subr.mxu0 0.0
    %42 = vmatpush1.xpose.msra.mxu0 0.0
    %43 = vmatprep.subr.mxu0 0.0
    %44 = vmatpush1.xpose.msra.mxu0 0.0
    %45 = vmatprep.subr.mxu0 0.0
    %46 = vmatpush1.xpose.msra.mxu0 0.0
    %47 = vmatprep.subr.mxu0 0.0
    %48 = vmatpush1.xpose.msra.mxu0 0.0
    %49 = vmatprep.subr.mxu0 0.0
    %50 = vmatpush1.xpose.msra.mxu0 0.0
    %51 = vmatprep.subr.mxu0 0.0
    %52 = vmatpush1.xpose.msra.mxu0 0.0
    %53 = vmatprep.subr.mxu0 0.0
    %54 = vmatpush1.xpose.msra.mxu0 0.0
    %55 = vmatprep.subr.mxu0 0.0
    %56 = vmatpush1.xpose.msra.mxu0 0.0
    %57 = vmatprep.subr.mxu0 0.0
    %58 = vmatpush1.xpose.msra.mxu0 0.0
    %59 = vmatprep.subr.mxu0 0.0
    %60 = vmatpush1.xpose.msra.mxu0 0.0
    %61 = vmatprep.subr.mxu0 0.0
    %62 = vmatpush1.xpose.msra.mxu0 0.0
    %63 = vmatprep.subr.mxu0 0.0
    %64 = vmatpush1.xpose.msra.mxu0 0.0
    %65 = vmatprep.subr.mxu0 0.0
    %66 = vmatpush1.xpose.msra.mxu0 0.0
    %67 = vmatprep.subr.mxu0 0.0
    %68 = vmatpush1.xpose.msra.mxu0 0.0
    %69 = vmatprep.subr.mxu0 0.0
    %70 = vmatpush1.xpose.msra.mxu0 0.0
    %71 = vmatprep.subr.mxu0 0.0
    %72 = vmatpush1.xpose.msra.mxu0 0.0
    %73 = vmatprep.subr.mxu0 0.0
    %74 = vmatpush1.xpose.msra.mxu0 0.0
    %75 = vmatprep.subr.mxu0 0.0
    %76 = vmatpush1.xpose.msra.mxu0 0.0
    %77 = vmatprep.subr.mxu0 0.0
    %78 = vmatpush1.xpose.msra.mxu0 0.0
    %79 = vmatprep.subr.mxu0 0.0
    %80 = vmatpush1.xpose.msra.mxu0 0.0
    %81 = vmatprep.subr.mxu0 0.0
    %82 = vmatpush1.xpose.msra.mxu0 0.0
    %83 = vmatprep.subr.mxu0 0.0
    %84 = vmatpush1.xpose.msra.mxu0 0.0
    %85 = vmatprep.subr.mxu0 0.0
    %86 = vmatpush1.xpose.msra.mxu0 0.0
    %87 = vmatprep.subr.mxu0 0.0
    %88 = vmatpush1.xpose.msra.mxu0 0.0
    %89 = vmatprep.subr.mxu0 0.0
    %90 = vmatpush1.xpose.msra.mxu0 0.0
    %91 = vmatprep.subr.mxu0 0.0
    %92 = vmatpush1.xpose.msra.mxu0 0.0
    %93 = vmatprep.subr.mxu0 0.0
    %94 = vmatpush1.xpose.msra.mxu0 0.0
    %95 = vmatprep.subr.mxu0 0.0
    %96 = vmatpush1.xpose.msra.mxu0 0.0
    %97 = vmatprep.subr.mxu0 0.0
    %98 = vmatpush1.xpose.msra.mxu0 0.0
    %99 = vmatprep.subr.mxu0 0.0
    %100 = vmatpush1.xpose.msra.mxu0 0.0
    %101 = vmatprep.subr.mxu0 0.0
    %102 = vmatpush1.xpose.msra.mxu0 0.0
    %103 = vmatprep.mubr.f32.mxu0 0.0
    %104 = vmatmul.mubr.f32.gmra.mrb[0].mxu0 %v34
    %v105 = vpop.f32.mrb[0].mxu0
    %v106 = vadd.f32 %v31, %v105
    %v107 = vpop.f32.mrb[0].mxu0
    %108 = vdwg.mxu0
    %v109 = vxor.u32 %v106, 2147483648
    %v110 = vmul.f32 %v109, 1.442695
    %v111 = vpow.pop %v110
    %v112 = vadd.f32 %v111, 1.0
    %v113 = vrcp.pop %v112
    %v114 = vmul.f32 1.0, %v113
    %vm115 = vcmask 57344
    %116 = vst.msk [vmem:[#allocation6] sm:$0x1] %vm115, %v114
    // Predicated region
    $region18: #{mlp_discriminator.1} parent=1 // pred_check
      _
    $region19: #{mlp_discriminator.1} parent=1 // pred_check_branch
      %118 = sbr.rel (0) target = $region21
    $region20: #{mlp_discriminator.1} parent=1 // pred_region
      %s120 = ssub.s32 16, 16
      %121 = vsyncadd [#allocation5], %s120
      %s123 = sshll.u32 [#allocation6], 4
      %s124 = int_to_ptr.vmem [resolvable:$true] %s123
      %126 = dma.vmem_to_hbm [thread:$0]  %s124, 16, %s3, [#allocation5]
    $region21: #{mlp_discriminator.1} parent=1 // pred_fallthru
      _
    // Predicated region
    $region22: #{mlp_discriminator.1} parent=1 // pred_check
      _
    $region23: #{mlp_discriminator.1} parent=1 // pred_check_branch
      %128 = sbr.rel (0) target = $region25
    $region24: #{mlp_discriminator.1} parent=1 // pred_region
      %129 = dma.done [#allocation5], 16
    $region25: #{mlp_discriminator.1} parent=1 // pred_fallthru
      _
    %130 = vsyncpa [#allocation4], 1
    %131 = vsyncpa [#allocation5], 1

</llo_original>
